<compile_context>
chip_gen: v7x
topology: tpu7x:2x2x1
jax: 0.10.0
libtpu: 0.0.40
codegen_flags: <defaults>
</compile_context>

<pallas_src>
import jax
import jax.numpy as jnp
from jax import lax
from jax.experimental import pallas as pl
from jax.experimental.pallas import tpu as pltpu

LANE = 128


def _round_up(n: int, m: int) -> int:
    return ((n + m - 1) // m) * m


# --------------------------------------------------------------------------
# Kernels
# --------------------------------------------------------------------------
def modelg_step_kernel(act_ref,   # VMEM [B, 1]        int32
                       x_ref,     # VMEM [B, Ip]       f32   (prev_state, lane-padded)
                       w1_ref,    # VMEM [Ip, Hp]      bf16  (zero-padded W1)
                       ew1_ref,   # VMEM [A, Hp]       bf16  (emb@W1 + b1, "ones" col)
                       wh_ref,    # VMEM [Hp, Pp]      bf16  ([Ws|Wr] + bias row)
                       out_ref):  # VMEM [B, Pp]       f32   ([next_state | reward | 0])
    B = x_ref.shape[0]
    A = ew1_ref.shape[0]

    # one-hot(action) built from an iota compare -> stays in registers, goes to MXU.
    act = act_ref[...]                                            # [B, 1] int32
    iota = lax.broadcasted_iota(jnp.int32, (B, A), 1)
    onehot = jnp.where(iota == act, 1.0, 0.0).astype(jnp.bfloat16)

    x = x_ref[...].astype(jnp.bfloat16)                           # [B, Ip]

    # h = ReLU(prev_state @ W1 + onehot @ (emb@W1 + b1))   (b1 folded at pack time)
    h = (jnp.dot(x, w1_ref[...], preferred_element_type=jnp.float32)
         + jnp.dot(onehot, ew1_ref[...], preferred_element_type=jnp.float32))
    h = jnp.maximum(h, 0.0).astype(jnp.bfloat16)
    # TODO(synk): training-mode dropout would need pltpu PRNG; identity in eval mode.

    # fused state_head + reward_head (+ biases via the "ones" column): one MXU pass,
    # lane-dense 128-wide store.
    out_ref[...] = jnp.dot(h, wh_ref[...], preferred_element_type=jnp.float32)


def modelg_rollout_kernel(act_ref,    # VMEM [1, B, 1]  int32  (this step's actions)
                          x0_ref,     # VMEM [B, Ip]    f32    (initial state, padded)
                          w1_ref,     # VMEM [Ip, Hp]   bf16   (resident across steps)
                          ew1_ref,    # VMEM [A, Hp]    bf16   (resident across steps)
                          wh_ref,     # VMEM [Hp, Pp]   bf16   (resident across steps)
                          out_ref,    # VMEM [1, B, Pp] f32    (this step's output)
                          state_ref): # VMEM scratch [B, Ip] f32 (carry across steps)
    k = pl.program_id(0)
    B = x0_ref.shape[0]
    A = ew1_ref.shape[0]

    @pl.when(k == 0)
    def _():
        state_ref[...] = x0_ref[...]

    act = act_ref[0]                                              # [B, 1] int32
    iota = lax.broadcasted_iota(jnp.int32, (B, A), 1)
    onehot = jnp.where(iota == act, 1.0, 0.0).astype(jnp.bfloat16)

    x = state_ref[...].astype(jnp.bfloat16)
    h = (jnp.dot(x, w1_ref[...], preferred_element_type=jnp.float32)
         + jnp.dot(onehot, ew1_ref[...], preferred_element_type=jnp.float32))
    h = jnp.maximum(h, 0.0).astype(jnp.bfloat16)

    out = jnp.dot(h, wh_ref[...], preferred_element_type=jnp.float32)   # [B, Pp]
    out_ref[0] = out
    # Carry the full padded slab; W1 rows >= input_size are zero so the reward /
    # padding columns contribute nothing to the next step (requires out==in size).
    state_ref[...] = out


# --------------------------------------------------------------------------
# Parameter packing
# --------------------------------------------------------------------------
def init_params(key, num_actions, input_size, hidden_size, output_size):
    """Canonical (unpacked) parameters, weights already [in, out] so y = x @ W + b."""
    ks = jax.random.split(key, 7)
    return {
        "emb": jax.random.normal(ks[0], (num_actions, input_size), jnp.float32) * 0.1,
        "w1":  jax.random.normal(ks[1], (input_size, hidden_size), jnp.float32) * 0.1,
        "b1":  jax.random.normal(ks[2], (1, hidden_size), jnp.float32) * 0.01,
        "ws":  jax.random.normal(ks[3], (hidden_size, output_size), jnp.float32) * 0.1,
        "bs":  jax.random.normal(ks[4], (1, output_size), jnp.float32) * 0.01,
        "wr":  jax.random.normal(ks[5], (hidden_size, 1), jnp.float32) * 0.1,
        "br":  jax.random.normal(ks[6], (1, 1), jnp.float32) * 0.01,
    }


def pack_params(params):
    """One-time packing into the fused, lane-padded, bf16 kernel layout."""
    input_size, hidden = params["w1"].shape
    num_actions = params["emb"].shape[0]
    output_size = params["ws"].shape[1]

    Ip = _round_up(input_size, LANE)       # padded input width (LHS lane-dense)
    Hp = _round_up(hidden + 1, LANE)       # padded hidden width (+1 reserves ones-col)
    Pp = _round_up(output_size + 1, LANE)  # padded fused-head width (state | reward)
    one_col = Hp - 1                       # hidden "ones" column -> carries head biases

    w1_p = jnp.zeros((Ip, Hp), jnp.float32).at[:input_size, :hidden].set(params["w1"])

    # emb @ W1 with b1 folded in (each one-hot row picks exactly one row).
    ew1 = params["emb"] @ params["w1"] + params["b1"]
    ew1_p = (jnp.zeros((num_actions, Hp), jnp.float32)
             .at[:, :hidden].set(ew1)
             .at[:, one_col].set(1.0))     # h[:, one_col] == 1 after ReLU

    wh_p = (jnp.zeros((Hp, Pp), jnp.float32)
            .at[:hidden, :output_size].set(params["ws"])
            .at[:hidden, output_size].set(params["wr"][:, 0])
            .at[one_col, :output_size].set(params["bs"][0])
            .at[one_col, output_size].set(params["br"][0, 0]))

    return {
        "w1":  w1_p.astype(jnp.bfloat16),
        "ew1": ew1_p.astype(jnp.bfloat16),
        "wh":  wh_p.astype(jnp.bfloat16),
        "input_size": input_size,
        "output_size": output_size,
        "num_actions": num_actions,
    }


def _pad_state(prev_state, Ip):
    B, in_sz = prev_state.shape
    return jnp.zeros((B, Ip), jnp.float32).at[:, :in_sz].set(prev_state.astype(jnp.float32))


# --------------------------------------------------------------------------
# Wrappers
# --------------------------------------------------------------------------
def modelg_forward(prev_state, action, packed):
    """Single dynamics step. prev_state: [B, input_size] f32, action: [B] int."""
    B = prev_state.shape[0]
    Ip = packed["w1"].shape[0]
    Pp = packed["wh"].shape[1]
    O = packed["output_size"]

    x = _pad_state(prev_state, Ip)
    out = pl.pallas_call(
        modelg_step_kernel,
        out_shape=jax.ShapeDtypeStruct((B, Pp), jnp.float32),
        in_specs=[pl.BlockSpec(memory_space=pltpu.VMEM)] * 5,
        out_specs=pl.BlockSpec(memory_space=pltpu.VMEM),
    )(action.astype(jnp.int32).reshape(B, 1), x,
      packed["w1"], packed["ew1"], packed["wh"])
    # lane-dense fused output: [:, :O] = next_state, [:, O] = reward
    return out[:, :O], out[:, O]


def modelg_rollout(prev_state, actions, packed):
    """K dynamics steps in ONE pallas_call (weights VMEM-resident across steps).

    prev_state: [B, input_size] f32, actions: [K, B] int.
    Returns next_states [K, B, output_size], rewards [K, B].
    """
    K, B = actions.shape
    Ip, Hp = packed["w1"].shape
    A = packed["num_actions"]
    Pp = packed["wh"].shape[1]
    O = packed["output_size"]
    assert O == packed["input_size"] and Ip == Pp, \
        "rollout requires output_size == input_size (state feeds back)"

    x0 = _pad_state(prev_state, Ip)
    acts = actions.astype(jnp.int32).reshape(K, B, 1)

    out = pl.pallas_call(
        modelg_rollout_kernel,
        out_shape=jax.ShapeDtypeStruct((K, B, Pp), jnp.float32),
        grid=(K,),
        in_specs=[
            pl.BlockSpec((1, B, 1), lambda k: (k, 0, 0)),   # per-step actions
            pl.BlockSpec((B, Ip),   lambda k: (0, 0)),      # initial state (once)
            pl.BlockSpec((Ip, Hp),  lambda k: (0, 0)),      # W1       (resident)
            pl.BlockSpec((A, Hp),   lambda k: (0, 0)),      # emb@W1+b1 (resident)
            pl.BlockSpec((Hp, Pp),  lambda k: (0, 0)),      # fused head (resident)
        ],
        out_specs=pl.BlockSpec((1, B, Pp), lambda k: (k, 0, 0)),
        scratch_shapes=[pltpu.VMEM((B, Ip), jnp.float32)],  # state carry
        compiler_params=pltpu.CompilerParams(
            dimension_semantics=("arbitrary",)),            # sequential carry
    )(acts, x0, packed["w1"], packed["ew1"], packed["wh"])
    return out[:, :, :O], out[:, :, O]


# --------------------------------------------------------------------------
# References
# --------------------------------------------------------------------------
def modelg_reference(prev_state, action, params):
    """Pure-f32 reference of the original module semantics."""
    x = prev_state + jnp.take(params["emb"], action, axis=0)
    h = jnp.maximum(x @ params["w1"] + params["b1"], 0.0)
    ns = h @ params["ws"] + params["bs"]
    rw = (h @ params["wr"] + params["br"])[:, 0]
    return ns, rw


def packed_reference(prev_state, action, packed):
    """Exact replica of the kernel's packed bf16 math (tight-tolerance check)."""
    Ip = packed["w1"].shape[0]
    A = packed["num_actions"]
    O = packed["output_size"]
    x = _pad_state(prev_state, Ip).astype(jnp.bfloat16)
    onehot = jax.nn.one_hot(action, A, dtype=jnp.bfloat16)
    h = (jnp.dot(x, packed["w1"], preferred_element_type=jnp.float32)
         + jnp.dot(onehot, packed["ew1"], preferred_element_type=jnp.float32))
    h = jnp.maximum(h, 0.0).astype(jnp.bfloat16)
    out = jnp.dot(h, packed["wh"], preferred_element_type=jnp.float32)
    return out[:, :O], out[:, O]


def packed_rollout_reference(prev_state, actions, packed):
    """Iterated replica of the rollout kernel's packed bf16 math."""
    K = actions.shape[0]
    Ip = packed["w1"].shape[0]
    A = packed["num_actions"]
    O = packed["output_size"]
    state = _pad_state(prev_state, Ip)
    ns_list, rw_list = [], []
    for k in range(K):
        x = state.astype(jnp.bfloat16)
        onehot = jax.nn.one_hot(actions[k], A, dtype=jnp.bfloat16)
        h = (jnp.dot(x, packed["w1"], preferred_element_type=jnp.float32)
             + jnp.dot(onehot, packed["ew1"], preferred_element_type=jnp.float32))
        h = jnp.maximum(h, 0.0).astype(jnp.bfloat16)
        out = jnp.dot(h, packed["wh"], preferred_element_type=jnp.float32)
        ns_list.append(out[:, :O])
        rw_list.append(out[:, O])
        state = out
    return jnp.stack(ns_list), jnp.stack(rw_list)


# --------------------------------------------------------------------------
if __name__ == "__main__":
    key = jax.random.PRNGKey(0)
    B, input_size, hidden_size, output_size, num_actions, K = 8, 32, 32, 32, 16, 5

    kp, kx, ka, kr = jax.random.split(key, 4)
    params = init_params(kp, num_actions, input_size, hidden_size, output_size)
    packed = pack_params(params)

    prev_state = jax.random.normal(kx, (B, input_size), jnp.float32)
    action = jax.random.randint(ka, (B,), 0, num_actions, jnp.int32)
    actions = jax.random.randint(kr, (K, B), 0, num_actions, jnp.int32)

    # ---- single dynamics step ----
    next_state, reward = modelg_forward(prev_state, action, packed)
    jax.block_until_ready((next_state, reward))
    assert next_state.shape == (B, output_size) and reward.shape == (B,)

    ns_pk, rw_pk = packed_reference(prev_state, action, packed)
    assert jnp.allclose(next_state, ns_pk, atol=1e-4)
    assert jnp.allclose(reward, rw_pk, atol=1e-4)

    ns_f32, rw_f32 = modelg_reference(prev_state, action, params)   # bf16-weight delta only
    assert jnp.allclose(next_state, ns_f32, atol=5e-2)
    assert jnp.allclose(reward, rw_f32, atol=5e-2)

    # ---- K-step rollout in one pallas_call (weights resident) ----
    ns_roll, rw_roll = modelg_rollout(prev_state, actions, packed)
    jax.block_until_ready((ns_roll, rw_roll))
    assert ns_roll.shape == (K, B, output_size) and rw_roll.shape == (K, B)

    ns_rp, rw_rp = packed_rollout_reference(prev_state, actions, packed)
    assert jnp.allclose(ns_roll, ns_rp, atol=1e-3)
    assert jnp.allclose(rw_roll, rw_rp, atol=1e-3)

    print("KERNEL_OK")
</pallas_src>

<mosaic_0001>
module attributes {stable_mosaic.version = 11 : i64} {
  func.func @modelg_step_kernel(%arg0: memref<8x1xi32, #tpu.memory_space<vmem>>, %arg1: memref<8x128xf32, #tpu.memory_space<vmem>>, %arg2: memref<128x128xbf16, #tpu.memory_space<vmem>>, %arg3: memref<16x128xbf16, #tpu.memory_space<vmem>>, %arg4: memref<128x128xbf16, #tpu.memory_space<vmem>>, %arg5: memref<8x128xf32, #tpu.memory_space<vmem>>) attributes {dimension_semantics = [], scalar_prefetch = 0 : i64, scratch_operands = 0 : i64, tpu.core_type = #tpu.core_type<tc>} {
    %c0 = arith.constant 0 : index
    %c0_0 = arith.constant 0 : index
    %0 = vector.load %arg0[%c0, %c0_0] : memref<8x1xi32, #tpu.memory_space<vmem>>, vector<8x1xi32>
    %1 = tpu.iota {dimensions = array<i32: 1>} : vector<8x16xi32>
    %2 = vector.broadcast %0 : vector<8x1xi32> to vector<8x16xi32>
    %3 = arith.cmpi eq, %1, %2 : vector<8x16xi32>
    %cst = arith.constant 1.000000e+00 : f32
    %cst_1 = arith.constant 0.000000e+00 : f32
    %4 = vector.broadcast %cst : f32 to vector<8x16xf32>
    %5 = vector.broadcast %cst_1 : f32 to vector<8x16xf32>
    %6 = arith.select %3, %4, %5 : vector<8x16xi1>, vector<8x16xf32>
    %7 = arith.truncf %6 : vector<8x16xf32> to vector<8x16xbf16>
    %c0_2 = arith.constant 0 : index
    %c0_3 = arith.constant 0 : index
    %8 = vector.load %arg1[%c0_2, %c0_3] : memref<8x128xf32, #tpu.memory_space<vmem>>, vector<8x128xf32>
    %9 = arith.truncf %8 : vector<8x128xf32> to vector<8x128xbf16>
    %c0_4 = arith.constant 0 : index
    %c0_5 = arith.constant 0 : index
    %10 = vector.load %arg2[%c0_4, %c0_5] : memref<128x128xbf16, #tpu.memory_space<vmem>>, vector<128x128xbf16>
    %cst_6 = arith.constant dense<0.000000e+00> : vector<8x128xf32>
    %11 = tpu.matmul %9, %10, %cst_6 {dimension_numbers = #tpu.dot_dimension_numbers<[1], [0], [0], [1], [0, 0, 1, 1], [], []>} : vector<8x128xbf16>, vector<128x128xbf16>, vector<8x128xf32> -> vector<8x128xf32>
    %c0_7 = arith.constant 0 : index
    %c0_8 = arith.constant 0 : index
    %12 = vector.load %arg3[%c0_7, %c0_8] : memref<16x128xbf16, #tpu.memory_space<vmem>>, vector<16x128xbf16>
    %cst_9 = arith.constant dense<0.000000e+00> : vector<8x128xf32>
    %13 = tpu.matmul %7, %12, %cst_9 {dimension_numbers = #tpu.dot_dimension_numbers<[1], [0], [0], [1], [0, 0, 1, 1], [], []>} : vector<8x16xbf16>, vector<16x128xbf16>, vector<8x128xf32> -> vector<8x128xf32>
    %14 = arith.addf %11, %13 : vector<8x128xf32>
    %cst_10 = arith.constant 0.000000e+00 : f32
    %15 = vector.broadcast %cst_10 : f32 to vector<8x128xf32>
    %16 = arith.maximumf %14, %15 : vector<8x128xf32>
    %17 = arith.truncf %16 : vector<8x128xf32> to vector<8x128xbf16>
    %c0_11 = arith.constant 0 : index
    %c0_12 = arith.constant 0 : index
    %18 = vector.load %arg4[%c0_11, %c0_12] : memref<128x128xbf16, #tpu.memory_space<vmem>>, vector<128x128xbf16>
    %cst_13 = arith.constant dense<0.000000e+00> : vector<8x128xf32>
    %19 = tpu.matmul %17, %18, %cst_13 {dimension_numbers = #tpu.dot_dimension_numbers<[1], [0], [0], [1], [0, 0, 1, 1], [], []>} : vector<8x128xbf16>, vector<128x128xbf16>, vector<8x128xf32> -> vector<8x128xf32>
    %c0_14 = arith.constant 0 : index
    %c0_15 = arith.constant 0 : index
    %20 = vector.load %arg5[%c0_14, %c0_15] : memref<8x128xf32, #tpu.memory_space<vmem>>, vector<8x128xf32>
    tpu.vector_store %arg5[%c0_14, %c0_15], %19 {strides = array<i32>} : memref<8x128xf32, #tpu.memory_space<vmem>>, vector<8x128xf32>,
    return
  }
}

</mosaic_0001>

<llo_original>
// kernel: tpu_custom_call.1
$region0: #{tpu_custom_call.1}
  #allocation0 [shape = 'u32[]', space=smem, size = 0x4, offset = 0x4, fixed_abs, tag = 'smem constant byte address 0x4 - core index']
  #allocation1 [shape = 'u32[144,128]{1,0:T(1,128)}', space=vmem, size = 0x12000, scoped, tag = 'internal scratch']
  %s0 = inlined_call_operand.vmem [shape: s32[8,1], index: 0, kind: input, shape index: {}]
  %s1 = inlined_call_operand.vmem [shape: f32[8,128], index: 1, kind: input, shape index: {}]
  %s2 = inlined_call_operand.hbm [shape: bf16[128,128], index: 2, kind: input, shape index: {}]
  %s3 = inlined_call_operand.vmem [shape: bf16[16,128], index: 3, kind: input, shape index: {}]
  %s4 = inlined_call_operand.hbm [shape: bf16[128,128], index: 4, kind: input, shape index: {}]
  %s5 = inlined_call_operand.hbm [shape: f32[8,128], index: 5, kind: output, shape index: {}]
  %s6 = sld [smem:[#allocation0]]
  $region38: #{tpu_custom_call.1} parent=0
    _
  %s8 = ssub.s32 1, %s6
  %s9 = scalar_select 0, %s8, %s6
  $region1: #{tpu_custom_call.1} parent=0
    #allocation2 [shape = 'u8[32768]{0}', space=vmem, size = 0x8000, scoped, tag = 'input window, operand 2, single buffered']
    #allocation3 [shape = 's32[1]{0}', space=sflag, size = 0x4, scoped, tag = 'scoped memory for tpu_custom_call.1']
    #allocation4 [shape = 's32[1]{0}', space=sflag, size = 0x4, scoped, tag = 'scoped memory for tpu_custom_call.1']
    #allocation5 [shape = 'u8[32768]{0}', space=vmem, size = 0x8000, scoped, tag = 'input window, operand 4, single buffered']
    #allocation6 [shape = 's32[1]{0}', space=sflag, size = 0x4, scoped, tag = 'scoped memory for tpu_custom_call.1']
    #allocation7 [shape = 'u8[4096]{0}', space=vmem, size = 0x1000, scoped, tag = 'output window, operand 0, single buffered']
    %10 = vsyncpa [#allocation3], 0
    %11 = vsyncpa [#allocation6], 0
    %12 = vsyncpa [#allocation4], 0
    // Predicated region
    $region2: #{tpu_custom_call.1} parent=1 // pred_check
      _
    $region3: #{tpu_custom_call.1} parent=1 // pred_check_branch
      %14 = sbr.rel (0) target = $region5
    $region4: #{tpu_custom_call.1} parent=1 // pred_region
      _
    $region5: #{tpu_custom_call.1} parent=1 // pred_fallthru
      _
    // Predicated region
    $region6: #{tpu_custom_call.1} parent=1 // pred_check
      _
    $region7: #{tpu_custom_call.1} parent=1 // pred_check_branch
      %16 = sbr.rel (0) target = $region9
    $region8: #{tpu_custom_call.1} parent=1 // pred_region
      _
    $region9: #{tpu_custom_call.1} parent=1 // pred_fallthru
      _
    // Predicated region
    $region10: #{tpu_custom_call.1} parent=1 // pred_check
      _
    $region11: #{tpu_custom_call.1} parent=1 // pred_check_branch
      %18 = sbr.rel (0) target = $region13
    $region12: #{tpu_custom_call.1} parent=1 // pred_region
      %s20 = ssub.s32 1024, 1024
      %21 = vsyncadd [#allocation3], %s20
      %s22 = sshll.u32 [#allocation2], 4
      %s23 = int_to_ptr.vmem [resolvable:$true] %s22
      %28 = dma.hbm_to_vmem [thread:$0]  %s2, 1024, %s23, [#allocation3], 64, 64, 4
    $region13: #{tpu_custom_call.1} parent=1 // pred_fallthru
      _
    // Predicated region
    $region14: #{tpu_custom_call.1} parent=1 // pred_check
      _
    $region15: #{tpu_custom_call.1} parent=1 // pred_check_branch
      %30 = sbr.rel (0) target = $region17
    $region16: #{tpu_custom_call.1} parent=1 // pred_region
      _
    $region17: #{tpu_custom_call.1} parent=1 // pred_fallthru
      _
    // Predicated region
    $region18: #{tpu_custom_call.1} parent=1 // pred_check
      _
    $region19: #{tpu_custom_call.1} parent=1 // pred_check_branch
      %32 = sbr.rel (0) target = $region21
    $region20: #{tpu_custom_call.1} parent=1 // pred_region
      %s34 = ssub.s32 1024, 1024
      %35 = vsyncadd [#allocation6], %s34
      %s36 = sshll.u32 [#allocation5], 4
      %s37 = int_to_ptr.vmem [resolvable:$true] %s36
      %42 = dma.hbm_to_vmem [thread:$0]  %s4, 1024, %s37, [#allocation6], 64, 64, 4
    $region21: #{tpu_custom_call.1} parent=1 // pred_fallthru
      _
    // Predicated region
    $region22: #{tpu_custom_call.1} parent=1 // pred_check
      _
    $region23: #{tpu_custom_call.1} parent=1 // pred_check_branch
      %44 = sbr.rel (0) target = $region25
    $region24: #{tpu_custom_call.1} parent=1 // pred_region
      %45 = dma.done [#allocation3], 1024
    $region25: #{tpu_custom_call.1} parent=1 // pred_fallthru
      _
    // Predicated region
    $region26: #{tpu_custom_call.1} parent=1 // pred_check
      _
    $region27: #{tpu_custom_call.1} parent=1 // pred_check_branch
      %47 = sbr.rel (0) target = $region29
    $region28: #{tpu_custom_call.1} parent=1 // pred_region
      %48 = dma.done [#allocation6], 1024
    $region29: #{tpu_custom_call.1} parent=1 // pred_fallthru
      _
    %v50 = vld [vmem:[%s0] sm:$0xff]
    %v51 = vlaneseq
    %v52 = vand.u32 %v51, 127
    %53 = vset.pattern.permute.xlu0 0
    %54 = vperm.xlu0 %53, %v50
    %v55 = vpop.permute.xlu0 %54
    %vm56 = vcmp.eq.s32.totalorder %v52, %v55
    %v57 = vsel %vm56, 1.0, 0.0
    %v58 = vpack.c.bf16 %v57, %v57
    %v59 = vld [vmem:[%s1] sm:$0xff]
    %v60 = vpack.c.bf16 %v59, %v59
    %v61 = vld [vmem:[#allocation2] sm:$0xf]
    %v62 = vld [vmem:[#allocation2 + $0x4] sm:$0xf]
    %v63 = vld [vmem:[#allocation2 + $0x8] sm:$0xf]
    %v64 = vld [vmem:[#allocation2 + $0xc] sm:$0xf]
    %v65 = vld [vmem:[#allocation2 + $0x10] sm:$0xf]
    %v66 = vld [vmem:[#allocation2 + $0x14] sm:$0xf]
    %v67 = vld [vmem:[#allocation2 + $0x18] sm:$0xf]
    %v68 = vld [vmem:[#allocation2 + $0x1c] sm:$0xf]
    %v69 = vld [vmem:[#allocation2 + $0x20] sm:$0xf]
    %v70 = vld [vmem:[#allocation2 + $0x24] sm:$0xf]
    %v71 = vld [vmem:[#allocation2 + $0x28] sm:$0xf]
    %v72 = vld [vmem:[#allocation2 + $0x2c] sm:$0xf]
    %v73 = vld [vmem:[#allocation2 + $0x30] sm:$0xf]
    %v74 = vld [vmem:[#allocation2 + $0x34] sm:$0xf]
    %v75 = vld [vmem:[#allocation2 + $0x38] sm:$0xf]
    %v76 = vld [vmem:[#allocation2 + $0x3c] sm:$0xf]
    %v77 = vld [vmem:[%s3] sm:$0xf]
    %v78 = vld [vmem:[%s3 + $0x4] sm:$0xf]
    %v81 = vunpack.c.l.b16 %v77
    %v82 = vunpack.c.l.b16 %v78
    %v83 = vpack.c.b16 %v82, %v81
    %vm85 = vcmask 130048
    %v87 = vsel %vm85, %v58, 0
    %89 = vmatprep.subr.bf16.mxu0 0
    %90 = vmatpush1.bf16.msra.mxu0 %v83
    %91 = vmatprep.subr.bf16.mxu0 0
    %92 = vmatpush1.bf16.msra.mxu0 0
    %93 = vmatprep.subr.bf16.mxu0 0
    %94 = vmatpush1.bf16.msra.mxu0 0
    %95 = vmatprep.subr.bf16.mxu0 0
    %96 = vmatpush1.bf16.msra.mxu0 0
    %97 = vmatprep.subr.bf16.mxu0 0
    %98 = vmatpush1.bf16.msra.mxu0 0
    %99 = vmatprep.subr.bf16.mxu0 0
    %100 = vmatpush1.bf16.msra.mxu0 0
    %101 = vmatprep.subr.bf16.mxu0 0
    %102 = vmatpush1.bf16.msra.mxu0 0
    %103 = vmatprep.subr.bf16.mxu0 0
    %104 = vmatpush1.bf16.msra.mxu0 0
    %105 = vmatprep.subr.bf16.mxu0 0
    %106 = vmatpush1.bf16.msra.mxu0 0
    %107 = vmatprep.subr.bf16.mxu0 0
    %108 = vmatpush1.bf16.msra.mxu0 0
    %109 = vmatprep.subr.bf16.mxu0 0
    %110 = vmatpush1.bf16.msra.mxu0 0
    %111 = vmatprep.subr.bf16.mxu0 0
    %112 = vmatpush1.bf16.msra.mxu0 0
    %113 = vmatprep.subr.bf16.mxu0 0
    %114 = vmatpush1.bf16.msra.mxu0 0
    %115 = vmatprep.subr.bf16.mxu0 0
    %116 = vmatpush1.bf16.msra.mxu0 0
    %117 = vmatprep.subr.bf16.mxu0 0
    %118 = vmatpush1.bf16.msra.mxu0 0
    %119 = vmatprep.subr.bf16.mxu0 0
    %120 = vmatpush1.bf16.msra.mxu0 0
    %121 = vmatprep.mubr.bf16.mxu0 0
    %122 = vmatmul.mubr.bf16.gmra.mrb[0].mxu0 %v87
    %v123 = vpop.f32.mrb[0].mxu0
    %v124 = vadd.f32 0.0, %v123
    %v125 = vpop.f32.mrb[0].mxu0
    %v126 = vpop.f32.mrb[0].mxu0
    %v127 = vpop.f32.mrb[0].mxu0
    %128 = vdwg.mxu0
    %v145 = vunpack.c.l.b16 %v61
    %v146 = vunpack.c.l.b16 %v62
    %v147 = vunpack.c.l.b16 %v63
    %v148 = vunpack.c.l.b16 %v64
    %v149 = vunpack.c.l.b16 %v65
    %v150 = vunpack.c.l.b16 %v66
    %v151 = vunpack.c.l.b16 %v67
    %v152 = vunpack.c.l.b16 %v68
    %v153 = vunpack.c.l.b16 %v69
    %v154 = vunpack.c.l.b16 %v70
    %v155 = vunpack.c.l.b16 %v71
    %v156 = vunpack.c.l.b16 %v72
    %v157 = vunpack.c.l.b16 %v73
    %v158 = vunpack.c.l.b16 %v74
    %v159 = vunpack.c.l.b16 %v75
    %v160 = vunpack.c.l.b16 %v76
    %v161 = vpack.c.b16 %v146, %v145
    %v162 = vpack.c.b16 %v148, %v147
    %v163 = vpack.c.b16 %v150, %v149
    %v164 = vpack.c.b16 %v152, %v151
    %v165 = vpack.c.b16 %v154, %v153
    %v166 = vpack.c.b16 %v156, %v155
    %v167 = vpack.c.b16 %v158, %v157
    %v168 = vpack.c.b16 %v160, %v159
    %177 = vmatprep.subr.bf16.mxu0 0
    %178 = vmatpush1.bf16.msra.mxu0 %v161
    %179 = vmatprep.subr.bf16.mxu0 0
    %180 = vmatpush1.bf16.msra.mxu0 %v162
    %181 = vmatprep.subr.bf16.mxu0 0
    %182 = vmatpush1.bf16.msra.mxu0 %v163
    %183 = vmatprep.subr.bf16.mxu0 0
    %184 = vmatpush1.bf16.msra.mxu0 %v164
    %185 = vmatprep.subr.bf16.mxu0 0
    %186 = vmatpush1.bf16.msra.mxu0 %v165
    %187 = vmatprep.subr.bf16.mxu0 0
    %188 = vmatpush1.bf16.msra.mxu0 %v166
    %189 = vmatprep.subr.bf16.mxu0 0
    %190 = vmatpush1.bf16.msra.mxu0 %v167
    %191 = vmatprep.subr.bf16.mxu0 0
    %192 = vmatpush1.bf16.msra.mxu0 %v168
    %193 = vmatprep.subr.bf16.mxu0 0
    %194 = vmatpush1.bf16.msra.mxu0 0
    %195 = vmatprep.subr.bf16.mxu0 0
    %196 = vmatpush1.bf16.msra.mxu0 0
    %197 = vmatprep.subr.bf16.mxu0 0
    %198 = vmatpush1.bf16.msra.mxu0 0
    %199 = vmatprep.subr.bf16.mxu0 0
    %200 = vmatpush1.bf16.msra.mxu0 0
    %201 = vmatprep.subr.bf16.mxu0 0
    %202 = vmatpush1.bf16.msra.mxu0 0
    %203 = vmatprep.subr.bf16.mxu0 0
    %204 = vmatpush1.bf16.msra.mxu0 0
    %205 = vmatprep.subr.bf16.mxu0 0
    %206 = vmatpush1.bf16.msra.mxu0 0
    %207 = vmatprep.subr.bf16.mxu0 0
    %208 = vmatpush1.bf16.msra.mxu0 0
    %209 = vmatprep.mubr.bf16.mxu0 0
    %210 = vmatmul.mubr.bf16.gmra.mrb[0].mxu0 %v60
    %v211 = vpop.f32.mrb[0].mxu0
    %v212 = vadd.f32 %v124, %v211
    %v213 = vpop.f32.mrb[0].mxu0
    %v214 = vpop.f32.mrb[0].mxu0
    %v215 = vpop.f32.mrb[0].mxu0
    %216 = vdwg.mxu0
    %v217 = vmax.f32 %v212, 0.0
    %v218 = vpack.c.bf16 %v217, %v217
    %v219 = vld [vmem:[#allocation5] sm:$0xf]
    %v220 = vld [vmem:[#allocation5 + $0x4] sm:$0xf]
    %v221 = vld [vmem:[#allocation5 + $0x8] sm:$0xf]
    %v222 = vld [vmem:[#allocation5 + $0xc] sm:$0xf]
    %v223 = vld [vmem:[#allocation5 + $0x10] sm:$0xf]
    %v224 = vld [vmem:[#allocation5 + $0x14] sm:$0xf]
    %v225 = vld [vmem:[#allocation5 + $0x18] sm:$0xf]
    %v226 = vld [vmem:[#allocation5 + $0x1c] sm:$0xf]
    %v227 = vld [vmem:[#allocation5 + $0x20] sm:$0xf]
    %v228 = vld [vmem:[#allocation5 + $0x24] sm:$0xf]
    %v229 = vld [vmem:[#allocation5 + $0x28] sm:$0xf]
    %v230 = vld [vmem:[#allocation5 + $0x2c] sm:$0xf]
    %v231 = vld [vmem:[#allocation5 + $0x30] sm:$0xf]
    %v232 = vld [vmem:[#allocation5 + $0x34] sm:$0xf]
    %v233 = vld [vmem:[#allocation5 + $0x38] sm:$0xf]
    %v234 = vld [vmem:[#allocation5 + $0x3c] sm:$0xf]
    %v251 = vunpack.c.l.b16 %v219
    %v252 = vunpack.c.l.b16 %v220
    %v253 = vunpack.c.l.b16 %v221
    %v254 = vunpack.c.l.b16 %v222
    %v255 = vunpack.c.l.b16 %v223
    %v256 = vunpack.c.l.b16 %v224
    %v257 = vunpack.c.l.b16 %v225
    %v258 = vunpack.c.l.b16 %v226
    %v259 = vunpack.c.l.b16 %v227
    %v260 = vunpack.c.l.b16 %v228
    %v261 = vunpack.c.l.b16 %v229
    %v262 = vunpack.c.l.b16 %v230
    %v263 = vunpack.c.l.b16 %v231
    %v264 = vunpack.c.l.b16 %v232
    %v265 = vunpack.c.l.b16 %v233
    %v266 = vunpack.c.l.b16 %v234
    %v267 = vpack.c.b16 %v252, %v251
    %v268 = vpack.c.b16 %v254, %v253
    %v269 = vpack.c.b16 %v256, %v255
    %v270 = vpack.c.b16 %v258, %v257
    %v271 = vpack.c.b16 %v260, %v259
    %v272 = vpack.c.b16 %v262, %v261
    %v273 = vpack.c.b16 %v264, %v263
    %v274 = vpack.c.b16 %v266, %v265
    %283 = vmatprep.subr.bf16.mxu0 0
    %284 = vmatpush1.bf16.msra.mxu0 %v267
    %285 = vmatprep.subr.bf16.mxu0 0
    %286 = vmatpush1.bf16.msra.mxu0 %v268
    %287 = vmatprep.subr.bf16.mxu0 0
    %288 = vmatpush1.bf16.msra.mxu0 %v269
    %289 = vmatprep.subr.bf16.mxu0 0
    %290 = vmatpush1.bf16.msra.mxu0 %v270
    %291 = vmatprep.subr.bf16.mxu0 0
    %292 = vmatpush1.bf16.msra.mxu0 %v271
    %293 = vmatprep.subr.bf16.mxu0 0
    %294 = vmatpush1.bf16.msra.mxu0 %v272
    %295 = vmatprep.subr.bf16.mxu0 0
    %296 = vmatpush1.bf16.msra.mxu0 %v273
    %297 = vmatprep.subr.bf16.mxu0 0
    %298 = vmatpush1.bf16.msra.mxu0 %v274
    %299 = vmatprep.subr.bf16.mxu0 0
    %300 = vmatpush1.bf16.msra.mxu0 0
    %301 = vmatprep.subr.bf16.mxu0 0
    %302 = vmatpush1.bf16.msra.mxu0 0
    %303 = vmatprep.subr.bf16.mxu0 0
    %304 = vmatpush1.bf16.msra.mxu0 0
    %305 = vmatprep.subr.bf16.mxu0 0
    %306 = vmatpush1.bf16.msra.mxu0 0
    %307 = vmatprep.subr.bf16.mxu0 0
    %308 = vmatpush1.bf16.msra.mxu0 0
    %309 = vmatprep.subr.bf16.mxu0 0
    %310 = vmatpush1.bf16.msra.mxu0 0
    %311 = vmatprep.subr.bf16.mxu0 0
    %312 = vmatpush1.bf16.msra.mxu0 0
    %313 = vmatprep.subr.bf16.mxu0 0
    %314 = vmatpush1.bf16.msra.mxu0 0
    %315 = vmatprep.mubr.bf16.mxu0 0
    %316 = vmatmul.mubr.bf16.gmra.mrb[0].mxu0 %v218
    %v317 = vpop.f32.mrb[0].mxu0
    %v318 = vadd.f32 0.0, %v317
    %v319 = vpop.f32.mrb[0].mxu0
    %v320 = vpop.f32.mrb[0].mxu0
    %v321 = vpop.f32.mrb[0].mxu0
    %322 = vdwg.mxu0
    %323 = vst [vmem:[#allocation7] sm:$0xff] %v318
    // Predicated region
    $region30: #{tpu_custom_call.1} parent=1 // pred_check
      _
    $region31: #{tpu_custom_call.1} parent=1 // pred_check_branch
      %325 = sbr.rel (0) target = $region33
    $region32: #{tpu_custom_call.1} parent=1 // pred_region
      %s327 = ssub.s32 128, 128
      %328 = vsyncadd [#allocation4], %s327
      %s330 = sshll.u32 [#allocation7], 4
      %s331 = int_to_ptr.vmem [resolvable:$true] %s330
      %333 = dma.vmem_to_hbm [thread:$0]  %s331, 128, %s5, [#allocation4]
    $region33: #{tpu_custom_call.1} parent=1 // pred_fallthru
      _
    // Predicated region
    $region34: #{tpu_custom_call.1} parent=1 // pred_check
      _
    $region35: #{tpu_custom_call.1} parent=1 // pred_check_branch
      %335 = sbr.rel (0) target = $region37
    $region36: #{tpu_custom_call.1} parent=1 // pred_region
      %336 = dma.done [#allocation4], 128
    $region37: #{tpu_custom_call.1} parent=1 // pred_fallthru
      _
    %337 = vsyncpa [#allocation3], 1
    %338 = vsyncpa [#allocation6], 1
    %339 = vsyncpa [#allocation4], 1

</llo_original>
